<compile_context>
chip_gen: v7x
topology: tpu7x:2x2x1
jax: 0.10.0
libtpu: 0.0.40
codegen_flags: <defaults>
</compile_context>

<pallas_src>
import functools

import jax
import jax.numpy as jnp
from jax.experimental import pallas as pl
from jax.experimental.pallas import tpu as pltpu


# ----------------------------------------------------------------------------
# Pallas kernel (built as a closure over the static problem dims).
# ----------------------------------------------------------------------------
def _build_kernel(B, NF, K, L):
    D = 2 * L            # fused (price|volume) hidden width
    G = 8 * L            # fused gate width (128 for kernelsize=5 -> exact lane fit)
    FL = NF * L

    def kernel(pat_ref, wa_ref, wb_ref, out_ref, gx_ref, h_ref):
        # ---- Conv1d (+bias via ones-row augmentation) + ReLU: ONE MXU matmul ----------
        wc = wb_ref[FL:FL + 2 * NF, 0:2 * K + 2]          # (2NF, 2K+2) blockdiag conv w+b
        conv = jnp.maximum(
            jnp.dot(wc, pat_ref[...], preferred_element_type=jnp.float32), 0.0)  # (2NF, B*L)

        # ---- hoisted input projection: gates_x[b] = x_b @ W_ih + bias (prologue) ------
        wih_p = wa_ref[0:L, :]                            # (L, G)
        wih_v = wa_ref[L:D, :]                            # (L, G)
        bias = wa_ref[2 * D:2 * D + 1, :]                 # (1, G)
        for b in range(B):                                # static, off the critical path
            cp = conv[0:NF, b * L:(b + 1) * L]            # (NF, L) price conv for step b
            cv = conv[NF:2 * NF, b * L:(b + 1) * L]       # (NF, L) volume conv for step b
            gx_ref[b] = (jnp.dot(cp, wih_p, preferred_element_type=jnp.float32)
                         + jnp.dot(cv, wih_v, preferred_element_type=jnp.float32)
                         + bias)                          # (NF, G) lane-dense store

        # ---- serial fused LSTM: only h @ W_hh + activations on the critical path ------
        whh = wa_ref[D:2 * D, :]                          # (D, G) block-diagonal W_hh

        def step(b, carry):
            h, c = carry                                  # (NF, D) each
            gates = (jnp.dot(h, whh, preferred_element_type=jnp.float32)
                     + gx_ref[b])                         # (NF, G) == (NF, 128)
            sig = jax.nn.sigmoid(gates[:, :6 * L])        # one EUP push: i|f|o
            g = jnp.tanh(gates[:, 6 * L:])                # one EUP push: g
            i = sig[:, 0:D]
            f = sig[:, D:2 * D]
            o = sig[:, 2 * D:3 * D]
            c = f * c + i * g
            h = o * jnp.tanh(c)
            h_ref[b] = h
            return (h, c)

        h0 = jnp.zeros((NF, D), jnp.float32)
        c0 = jnp.zeros((NF, D), jnp.float32)
        jax.lax.fori_loop(0, B, step, (h0, c0),
                          unroll=True if B <= 8 else 4)

        # ---- folded Bilinear(FL,FL,36) + Dropout(eval) + Linear(36,1) epilogue --------
        # out[b] = x1[b] @ W_fold @ x2[b]^T + const; the (NF,L)->(FL,) flatten is absorbed
        # into per-filter weight-row slices (no in-kernel sublane->lane reshape).
        H = h_ref[...]                                    # (B, NF, D)
        WF = wb_ref[0:FL, 0:FL]                           # (FL, FL)
        const = wb_ref[FL + 2 * NF:FL + 2 * NF + 1, 0:1]  # (1, 1)
        y = jnp.zeros((B, FL), jnp.float32)
        for fi in range(NF):
            y = y + jnp.dot(H[:, fi, 0:L], WF[fi * L:(fi + 1) * L, :],
                            preferred_element_type=jnp.float32)            # (B, FL)
        prod = jnp.zeros((B, L), jnp.float32)
        for fj in range(NF):
            prod = prod + y[:, fj * L:(fj + 1) * L] * H[:, fj, L:D]        # (B, L)
        # TODO(synk): nn.Dropout(p=0.5) is treated as identity (inference/eval mode).
        out_ref[...] = jnp.sum(prod, axis=-1, keepdims=True) + const       # (B, 1)

    return kernel


# ----------------------------------------------------------------------------
# One-time weight preprocessing: fuse, fold and pack everything into 2 blobs.
# ----------------------------------------------------------------------------
def prepare_kernel_params(p):
    NF, K = p['wcp'].shape
    L = p['wih_p'].shape[1]
    D, G, FL = 2 * L, 8 * L, NF * L
    assert 2 * K + 2 <= FL, "conv weight rows must fit in the head blob's lane width"
    # Keep G (= 8L) a multiple of 128 (it is 128 for kernelsize=5) so every gate slice in
    # the recurrence stays lane-aligned; pad gate columns here if that ever changes.

    def fuse_w(wp, wv):
        # PyTorch gate row order is [i, f, g, o]; fused column order is
        # [i_p, i_v, f_p, f_v, o_p, o_v, g_p, g_v] (sigmoid gates first, tanh gate last).
        Z = jnp.zeros((L, L), jnp.float32)
        cols = []
        for g in (0, 1, 3, 2):
            cols.append(jnp.concatenate([wp[g * L:(g + 1) * L, :].T, Z], axis=0))
            cols.append(jnp.concatenate([Z, wv[g * L:(g + 1) * L, :].T], axis=0))
        return jnp.concatenate(cols, axis=1)              # (D, G) block-diagonal

    def fuse_b(bp, bv):
        segs = []
        for g in (0, 1, 3, 2):
            segs.append(bp[g * L:(g + 1) * L])
            segs.append(bv[g * L:(g + 1) * L])
        return jnp.concatenate(segs).reshape(1, G)

    wih = fuse_w(p['wih_p'], p['wih_v'])
    whh = fuse_w(p['whh_p'], p['whh_v'])
    bias = fuse_b(p['bih_p'] + p['bhh_p'], p['bih_v'] + p['bhh_v'])

    # Blob A (gates): rows [0:D)=W_ih, [D:2D)=W_hh, [2D]=bias; zero-padded to 8-row multiple.
    rows_a = 2 * D + 1
    blob_a = jnp.concatenate(
        [wih, whh, bias, jnp.zeros(((-rows_a) % 8, G), jnp.float32)], axis=0)

    # Conv weight with bias folded in (consumed against a ones-augmented patch matrix).
    zk = jnp.zeros((NF, K + 1), jnp.float32)
    wc = jnp.concatenate(
        [jnp.concatenate([p['wcp'], p['bcp'].reshape(NF, 1), zk], axis=1),
         jnp.concatenate([zk, p['wcv'], p['bcv'].reshape(NF, 1)], axis=1)], axis=0)  # (2NF, 2K+2)

    # Folded Bilinear(FL, FL, 36) + Linear(36, 1): W_fold = sum_o wlin[o] * W_bil[o].
    wlin_vec = p['wlin'].reshape(-1)
    wfold = jnp.einsum('o,oij->ij', wlin_vec, p['wbil'])  # (FL, FL)
    const = jnp.dot(wlin_vec, p['bbil']) + p['blin'][0]

    # Blob B (head + conv): rows [0:FL)=W_fold, [FL:FL+2NF)=conv weight, [FL+2NF]=const.
    wc_pad = jnp.pad(wc, ((0, 0), (0, FL - (2 * K + 2))))
    const_row = jnp.zeros((1, FL), jnp.float32).at[0, 0].set(const)
    rows_b = FL + 2 * NF + 1
    blob_b = jnp.concatenate(
        [wfold, wc_pad, const_row, jnp.zeros(((-rows_b) % 8, FL), jnp.float32)], axis=0)

    return dict(blob_a=blob_a, blob_b=blob_b)


# ----------------------------------------------------------------------------
# Per-call wrapper: ones-augmented im2col patches + pallas_call (3 input DMAs).
# ----------------------------------------------------------------------------
def _patches(price, volume, K, L):
    # rows: [price patches k=0..K-1 | ones | volume patches | ones]; col = b*L + l.
    B = price.shape[0]
    ones = jnp.ones((1, B * L), jnp.float32)
    pp = jnp.stack([price[:, k:k + L] for k in range(K)], 0).reshape(K, B * L)
    pv = jnp.stack([volume[:, k:k + L] for k in range(K)], 0).reshape(K, B * L)
    return jnp.concatenate([pp, ones, pv, ones], axis=0)


@functools.partial(jax.jit, static_argnames=("n_filters", "kernel_size"))
def cnn_lstm_forward(price, volume, blob_a, blob_b, *, n_filters, kernel_size):
    B, T = price.shape
    NF, K = n_filters, kernel_size
    L = T - K + 1
    D, G = 2 * L, 8 * L

    patches = _patches(price.astype(jnp.float32), volume.astype(jnp.float32), K, L)
    kernel = _build_kernel(B, NF, K, L)

    vmem = pl.BlockSpec(memory_space=pltpu.MemorySpace.VMEM)
    # Single program (no grid): one tiny, fully VMEM-resident instance.  With many
    # independent instances, stack them along the matmul M axis (never over B: B is the
    # LSTM sequence axis); on v7x add a "parallel" instance grid with constant index_maps
    # for the weight blobs so both TensorCores keep them VMEM-resident.
    return pl.pallas_call(
        kernel,
        out_shape=jax.ShapeDtypeStruct((B, 1), jnp.float32),
        in_specs=[vmem, vmem, vmem],
        out_specs=vmem,
        scratch_shapes=[pltpu.VMEM((B, NF, G), jnp.float32),   # hoisted gates_x
                        pltpu.VMEM((B, NF, D), jnp.float32)],  # LSTM hidden states
    )(patches, blob_a, blob_b)


# ----------------------------------------------------------------------------
# Deterministic parameter init (same shapes as the PyTorch module's __init__).
# ----------------------------------------------------------------------------
def init_params(key, n_filters, kernel_size, time_len=20, n_bilin=36):
    L = time_len - kernel_size + 1
    FL = n_filters * L
    ks = jax.random.split(key, 16)

    def u(k, shape, fan):
        s = 1.0 / float(fan) ** 0.5
        return jax.random.uniform(k, shape, jnp.float32, -s, s)

    return dict(
        wcp=u(ks[0], (n_filters, kernel_size), kernel_size),
        bcp=u(ks[1], (n_filters,), kernel_size),
        wcv=u(ks[2], (n_filters, kernel_size), kernel_size),
        bcv=u(ks[3], (n_filters,), kernel_size),
        wih_p=u(ks[4], (4 * L, L), L), whh_p=u(ks[5], (4 * L, L), L),
        bih_p=u(ks[6], (4 * L,), L), bhh_p=u(ks[7], (4 * L,), L),
        wih_v=u(ks[8], (4 * L, L), L), whh_v=u(ks[9], (4 * L, L), L),
        bih_v=u(ks[10], (4 * L,), L), bhh_v=u(ks[11], (4 * L,), L),
        wbil=u(ks[12], (n_bilin, FL, FL), FL),
        bbil=u(ks[13], (n_bilin,), FL),
        wlin=u(ks[14], (1, n_bilin), n_bilin),
        blin=u(ks[15], (1,), n_bilin),
    )


# ----------------------------------------------------------------------------
# Pure-JAX reference (mirrors the PyTorch forward) for correctness checking.
# ----------------------------------------------------------------------------
def reference_forward(price, volume, p):
    B = price.shape[0]
    NF, K = p['wcp'].shape
    L = price.shape[1] - K + 1

    def conv_relu(x, w, b):
        patches = jnp.stack([x[:, k:k + L] for k in range(K)], axis=-1)  # (B, L, K)
        out = jnp.einsum('blk,fk->bfl', patches, w) + b[None, :, None]
        return jax.nn.relu(out)

    def lstm(xseq, wih, whh, bih, bhh):
        def step(carry, x_t):
            h, c = carry
            gates = x_t @ wih.T + h @ whh.T + bih + bhh
            i, f, g, o = jnp.split(gates, 4, axis=-1)
            i, f, o = jax.nn.sigmoid(i), jax.nn.sigmoid(f), jax.nn.sigmoid(o)
            g = jnp.tanh(g)
            c = f * c + i * g
            h = o * jnp.tanh(c)
            return (h, c), h
        init = (jnp.zeros((NF, L), jnp.float32), jnp.zeros((NF, L), jnp.float32))
        _, hs = jax.lax.scan(step, init, xseq)
        return hs                                                        # (B, NF, L)

    hp = lstm(conv_relu(price, p['wcp'], p['bcp']),
              p['wih_p'], p['whh_p'], p['bih_p'], p['bhh_p'])
    hv = lstm(conv_relu(volume, p['wcv'], p['bcv']),
              p['wih_v'], p['whh_v'], p['bih_v'], p['bhh_v'])
    x1 = hp.reshape(B, -1)
    x2 = hv.reshape(B, -1)
    bil = jnp.einsum('bi,oij,bj->bo', x1, p['wbil'], x2) + p['bbil']
    return bil @ p['wlin'].T + p['blin']


if __name__ == "__main__":
    B = 2            # minibatch size (also the LSTM "sequence" length, as in the source)
    NF = 4           # n_filters
    K = 5            # kernelsize -> L = 16, FL = 64, fused gate width 8L = 128

    key = jax.random.PRNGKey(0)
    key_p, key_v, key_params = jax.random.split(key, 3)
    price = jax.random.uniform(key_p, (B, 20), jnp.float32)
    volume = jax.random.uniform(key_v, (B, 20), jnp.float32)
    params = init_params(key_params, NF, K)

    kp = prepare_kernel_params(params)    # one-time weight fuse/fold/pack

    out = cnn_lstm_forward(price, volume, kp['blob_a'], kp['blob_b'],
                           n_filters=NF, kernel_size=K)
    out = jax.block_until_ready(out)

    ref = jax.block_until_ready(reference_forward(price, volume, params))
    assert out.shape == (B, 1), out.shape
    if not jnp.allclose(out, ref, atol=2e-3, rtol=2e-2):
        raise AssertionError(f"kernel/reference mismatch:\n{out}\n{ref}")

    print("KERNEL_OK")
</pallas_src>

<mosaic_0001>
module attributes {stable_mosaic.version = 11 : i64} {
  func.func @kernel(%arg0: memref<12x32xf32, #tpu.memory_space<vmem>>, %arg1: memref<72x128xf32, #tpu.memory_space<vmem>>, %arg2: memref<80x64xf32, #tpu.memory_space<vmem>>, %arg3: memref<2x1xf32, #tpu.memory_space<vmem>>, %arg4: memref<2x4x128xf32, #tpu.memory_space<vmem>>, %arg5: memref<2x4x32xf32, #tpu.memory_space<vmem>>) attributes {dimension_semantics = [], scalar_prefetch = 0 : i64, scratch_operands = 2 : i64, tpu.core_type = #tpu.core_type<tc>} {
    %c64 = arith.constant 64 : index
    %c0 = arith.constant 0 : index
    %0 = vector.load %arg2[%c64, %c0] : memref<80x64xf32, #tpu.memory_space<vmem>>, vector<8x12xf32>
    %c0_0 = arith.constant 0 : index
    %c0_1 = arith.constant 0 : index
    %1 = vector.load %arg0[%c0_0, %c0_1] : memref<12x32xf32, #tpu.memory_space<vmem>>, vector<12x32xf32>
    %cst = arith.constant dense<0.000000e+00> : vector<8x32xf32>
    %2 = tpu.matmul %0, %1, %cst {dimension_numbers = #tpu.dot_dimension_numbers<[1], [0], [0], [1], [0, 0, 1, 1], [], []>} : vector<8x12xf32>, vector<12x32xf32>, vector<8x32xf32> -> vector<8x32xf32>
    %cst_2 = arith.constant 0.000000e+00 : f32
    %3 = vector.broadcast %cst_2 : f32 to vector<8x32xf32>
    %4 = arith.maximumf %2, %3 : vector<8x32xf32>
    %c0_3 = arith.constant 0 : index
    %c0_4 = arith.constant 0 : index
    %5 = vector.load %arg1[%c0_3, %c0_4] : memref<72x128xf32, #tpu.memory_space<vmem>>, vector<16x128xf32>
    %c16 = arith.constant 16 : index
    %c0_5 = arith.constant 0 : index
    %6 = vector.load %arg1[%c16, %c0_5] : memref<72x128xf32, #tpu.memory_space<vmem>>, vector<16x128xf32>
    %c64_6 = arith.constant 64 : index
    %c0_7 = arith.constant 0 : index
    %7 = vector.load %arg1[%c64_6, %c0_7] : memref<72x128xf32, #tpu.memory_space<vmem>>, vector<1x128xf32>
    %8 = vector.extract_strided_slice %4 {offsets = [0, 0], sizes = [4, 16], strides = [1, 1]} : vector<8x32xf32> to vector<4x16xf32>
    %9 = vector.extract_strided_slice %4 {offsets = [4, 0], sizes = [4, 16], strides = [1, 1]} : vector<8x32xf32> to vector<4x16xf32>
    %cst_8 = arith.constant dense<0.000000e+00> : vector<4x128xf32>
    %10 = tpu.matmul %8, %5, %cst_8 {dimension_numbers = #tpu.dot_dimension_numbers<[1], [0], [0], [1], [0, 0, 1, 1], [], []>} : vector<4x16xf32>, vector<16x128xf32>, vector<4x128xf32> -> vector<4x128xf32>
    %cst_9 = arith.constant dense<0.000000e+00> : vector<4x128xf32>
    %11 = tpu.matmul %9, %6, %cst_9 {dimension_numbers = #tpu.dot_dimension_numbers<[1], [0], [0], [1], [0, 0, 1, 1], [], []>} : vector<4x16xf32>, vector<16x128xf32>, vector<4x128xf32> -> vector<4x128xf32>
    %12 = arith.addf %10, %11 : vector<4x128xf32>
    %13 = vector.broadcast %7 : vector<1x128xf32> to vector<4x128xf32>
    %14 = arith.addf %12, %13 : vector<4x128xf32>
    %c0_10 = arith.constant 0 : index
    %c0_11 = arith.constant 0 : index
    %c0_12 = arith.constant 0 : index
    %15 = vector.load %arg4[%c0_10, %c0_11, %c0_12] : memref<2x4x128xf32, #tpu.memory_space<vmem>>, vector<1x4x128xf32>
    %16 = vector.shape_cast %15 : vector<1x4x128xf32> to vector<4x128xf32>
    %17 = vector.shape_cast %14 : vector<4x128xf32> to vector<1x4x128xf32>
    tpu.vector_store %arg4[%c0_10, %c0_11, %c0_12], %17 {strides = array<i32>} : memref<2x4x128xf32, #tpu.memory_space<vmem>>, vector<1x4x128xf32>,
    %18 = vector.extract_strided_slice %4 {offsets = [0, 16], sizes = [4, 16], strides = [1, 1]} : vector<8x32xf32> to vector<4x16xf32>
    %19 = vector.extract_strided_slice %4 {offsets = [4, 16], sizes = [4, 16], strides = [1, 1]} : vector<8x32xf32> to vector<4x16xf32>
    %cst_13 = arith.constant dense<0.000000e+00> : vector<4x128xf32>
    %20 = tpu.matmul %18, %5, %cst_13 {dimension_numbers = #tpu.dot_dimension_numbers<[1], [0], [0], [1], [0, 0, 1, 1], [], []>} : vector<4x16xf32>, vector<16x128xf32>, vector<4x128xf32> -> vector<4x128xf32>
    %cst_14 = arith.constant dense<0.000000e+00> : vector<4x128xf32>
    %21 = tpu.matmul %19, %6, %cst_14 {dimension_numbers = #tpu.dot_dimension_numbers<[1], [0], [0], [1], [0, 0, 1, 1], [], []>} : vector<4x16xf32>, vector<16x128xf32>, vector<4x128xf32> -> vector<4x128xf32>
    %22 = arith.addf %20, %21 : vector<4x128xf32>
    %23 = vector.broadcast %7 : vector<1x128xf32> to vector<4x128xf32>
    %24 = arith.addf %22, %23 : vector<4x128xf32>
    %c1 = arith.constant 1 : index
    %c0_15 = arith.constant 0 : index
    %c0_16 = arith.constant 0 : index
    %25 = vector.load %arg4[%c1, %c0_15, %c0_16] : memref<2x4x128xf32, #tpu.memory_space<vmem>>, vector<1x4x128xf32>
    %26 = vector.shape_cast %25 : vector<1x4x128xf32> to vector<4x128xf32>
    %27 = vector.shape_cast %24 : vector<4x128xf32> to vector<1x4x128xf32>
    tpu.vector_store %arg4[%c1, %c0_15, %c0_16], %27 {strides = array<i32>} : memref<2x4x128xf32, #tpu.memory_space<vmem>>, vector<1x4x128xf32>,
    %c32 = arith.constant 32 : index
    %c0_17 = arith.constant 0 : index
    %28 = vector.load %arg1[%c32, %c0_17] : memref<72x128xf32, #tpu.memory_space<vmem>>, vector<32x128xf32>
    %cst_18 = arith.constant 0.000000e+00 : f32
    %29 = vector.broadcast %cst_18 : f32 to vector<4x32xf32>
    %cst_19 = arith.constant 0.000000e+00 : f32
    %30 = vector.broadcast %cst_19 : f32 to vector<4x32xf32>
    %c0_i32 = arith.constant 0 : i32
    %cst_20 = arith.constant dense<0.000000e+00> : vector<4x128xf32>
    %31 = tpu.matmul %29, %28, %cst_20 {dimension_numbers = #tpu.dot_dimension_numbers<[1], [0], [0], [1], [0, 0, 1, 1], [], []>} : vector<4x32xf32>, vector<32x128xf32>, vector<4x128xf32> -> vector<4x128xf32>
    %32 = arith.index_cast %c0_i32 : i32 to index
    %c0_21 = arith.constant 0 : index
    %c0_22 = arith.constant 0 : index
    %33 = vector.load %arg4[%32, %c0_21, %c0_22] : memref<2x4x128xf32, #tpu.memory_space<vmem>>, vector<1x4x128xf32>
    %34 = vector.shape_cast %33 : vector<1x4x128xf32> to vector<4x128xf32>
    %35 = arith.addf %31, %34 : vector<4x128xf32>
    %36 = vector.extract_strided_slice %35 {offsets = [0, 0], sizes = [4, 96], strides = [1, 1]} : vector<4x128xf32> to vector<4x96xf32>
    %37 = arith.negf %36 : vector<4x96xf32>
    %38 = math.exp %37 : vector<4x96xf32>
    %cst_23 = arith.constant 1.000000e+00 : f32
    %39 = vector.broadcast %cst_23 : f32 to vector<4x96xf32>
    %40 = arith.addf %39, %38 : vector<4x96xf32>
    %41 = arith.divf %39, %40 : vector<4x96xf32>
    %42 = vector.extract_strided_slice %35 {offsets = [0, 96], sizes = [4, 32], strides = [1, 1]} : vector<4x128xf32> to vector<4x32xf32>
    %43 = math.tanh %42 : vector<4x32xf32>
    %44 = vector.extract_strided_slice %41 {offsets = [0, 0], sizes = [4, 32], strides = [1, 1]} : vector<4x96xf32> to vector<4x32xf32>
    %45 = vector.extract_strided_slice %41 {offsets = [0, 32], sizes = [4, 32], strides = [1, 1]} : vector<4x96xf32> to vector<4x32xf32>
    %46 = vector.extract_strided_slice %41 {offsets = [0, 64], sizes = [4, 32], strides = [1, 1]} : vector<4x96xf32> to vector<4x32xf32>
    %47 = arith.mulf %45, %30 : vector<4x32xf32>
    %48 = arith.mulf %44, %43 : vector<4x32xf32>
    %49 = arith.addf %47, %48 : vector<4x32xf32>
    %50 = math.tanh %49 : vector<4x32xf32>
    %51 = arith.mulf %46, %50 : vector<4x32xf32>
    %52 = arith.index_cast %c0_i32 : i32 to index
    %c0_24 = arith.constant 0 : index
    %c0_25 = arith.constant 0 : index
    %53 = vector.load %arg5[%52, %c0_24, %c0_25] : memref<2x4x32xf32, #tpu.memory_space<vmem>>, vector<1x4x32xf32>
    %54 = vector.shape_cast %53 : vector<1x4x32xf32> to vector<4x32xf32>
    %55 = vector.shape_cast %51 : vector<4x32xf32> to vector<1x4x32xf32>
    tpu.vector_store %arg5[%52, %c0_24, %c0_25], %55 {strides = array<i32>} : memref<2x4x32xf32, #tpu.memory_space<vmem>>, vector<1x4x32xf32>,
    %c1_i32 = arith.constant 1 : i32
    %cst_26 = arith.constant dense<0.000000e+00> : vector<4x128xf32>
    %56 = tpu.matmul %51, %28, %cst_26 {dimension_numbers = #tpu.dot_dimension_numbers<[1], [0], [0], [1], [0, 0, 1, 1], [], []>} : vector<4x32xf32>, vector<32x128xf32>, vector<4x128xf32> -> vector<4x128xf32>
    %57 = arith.index_cast %c1_i32 : i32 to index
    %c0_27 = arith.constant 0 : index
    %c0_28 = arith.constant 0 : index
    %58 = vector.load %arg4[%57, %c0_27, %c0_28] : memref<2x4x128xf32, #tpu.memory_space<vmem>>, vector<1x4x128xf32>
    %59 = vector.shape_cast %58 : vector<1x4x128xf32> to vector<4x128xf32>
    %60 = arith.addf %56, %59 : vector<4x128xf32>
    %61 = vector.extract_strided_slice %60 {offsets = [0, 0], sizes = [4, 96], strides = [1, 1]} : vector<4x128xf32> to vector<4x96xf32>
    %62 = arith.negf %61 : vector<4x96xf32>
    %63 = math.exp %62 : vector<4x96xf32>
    %cst_29 = arith.constant 1.000000e+00 : f32
    %64 = vector.broadcast %cst_29 : f32 to vector<4x96xf32>
    %65 = arith.addf %64, %63 : vector<4x96xf32>
    %66 = arith.divf %64, %65 : vector<4x96xf32>
    %67 = vector.extract_strided_slice %60 {offsets = [0, 96], sizes = [4, 32], strides = [1, 1]} : vector<4x128xf32> to vector<4x32xf32>
    %68 = math.tanh %67 : vector<4x32xf32>
    %69 = vector.extract_strided_slice %66 {offsets = [0, 0], sizes = [4, 32], strides = [1, 1]} : vector<4x96xf32> to vector<4x32xf32>
    %70 = vector.extract_strided_slice %66 {offsets = [0, 32], sizes = [4, 32], strides = [1, 1]} : vector<4x96xf32> to vector<4x32xf32>
    %71 = vector.extract_strided_slice %66 {offsets = [0, 64], sizes = [4, 32], strides = [1, 1]} : vector<4x96xf32> to vector<4x32xf32>
    %72 = arith.mulf %70, %49 : vector<4x32xf32>
    %73 = arith.mulf %69, %68 : vector<4x32xf32>
    %74 = arith.addf %72, %73 : vector<4x32xf32>
    %75 = math.tanh %74 : vector<4x32xf32>
    %76 = arith.mulf %71, %75 : vector<4x32xf32>
    %77 = arith.index_cast %c1_i32 : i32 to index
    %c0_30 = arith.constant 0 : index
    %c0_31 = arith.constant 0 : index
    %78 = vector.load %arg5[%77, %c0_30, %c0_31] : memref<2x4x32xf32, #tpu.memory_space<vmem>>, vector<1x4x32xf32>
    %79 = vector.shape_cast %78 : vector<1x4x32xf32> to vector<4x32xf32>
    %80 = vector.shape_cast %76 : vector<4x32xf32> to vector<1x4x32xf32>
    tpu.vector_store %arg5[%77, %c0_30, %c0_31], %80 {strides = array<i32>} : memref<2x4x32xf32, #tpu.memory_space<vmem>>, vector<1x4x32xf32>,
    %c2_i32 = arith.constant 2 : i32
    %c0_32 = arith.constant 0 : index
    %c0_33 = arith.constant 0 : index
    %c0_34 = arith.constant 0 : index
    %81 = vector.load %arg5[%c0_32, %c0_33, %c0_34] : memref<2x4x32xf32, #tpu.memory_space<vmem>>, vector<2x4x32xf32>
    %c0_35 = arith.constant 0 : index
    %c0_36 = arith.constant 0 : index
    %82 = vector.load %arg2[%c0_35, %c0_36] : memref<80x64xf32, #tpu.memory_space<vmem>>, vector<64x64xf32>
    %c72 = arith.constant 72 : index
    %c0_37 = arith.constant 0 : index
    %83 = vector.load %arg2[%c72, %c0_37] : memref<80x64xf32, #tpu.memory_space<vmem>>, vector<1x1xf32>
    %cst_38 = arith.constant 0.000000e+00 : f32
    %84 = vector.broadcast %cst_38 : f32 to vector<2x64xf32>
    %85 = vector.extract_strided_slice %81 {offsets = [0, 0, 0], sizes = [2, 1, 16], strides = [1, 1, 1]} : vector<2x4x32xf32> to vector<2x1x16xf32>
    %86 = vector.shape_cast %85 : vector<2x1x16xf32> to vector<2x16xf32>
    %87 = vector.extract_strided_slice %82 {offsets = [0, 0], sizes = [16, 64], strides = [1, 1]} : vector<64x64xf32> to vector<16x64xf32>
    %cst_39 = arith.constant dense<0.000000e+00> : vector<2x64xf32>
    %88 = tpu.matmul %86, %87, %cst_39 {dimension_numbers = #tpu.dot_dimension_numbers<[1], [0], [0], [1], [0, 0, 1, 1], [], []>} : vector<2x16xf32>, vector<16x64xf32>, vector<2x64xf32> -> vector<2x64xf32>
    %89 = arith.addf %84, %88 : vector<2x64xf32>
    %90 = vector.extract_strided_slice %81 {offsets = [0, 1, 0], sizes = [2, 1, 16], strides = [1, 1, 1]} : vector<2x4x32xf32> to vector<2x1x16xf32>
    %91 = vector.shape_cast %90 : vector<2x1x16xf32> to vector<2x16xf32>
    %92 = vector.extract_strided_slice %82 {offsets = [16, 0], sizes = [16, 64], strides = [1, 1]} : vector<64x64xf32> to vector<16x64xf32>
    %cst_40 = arith.constant dense<0.000000e+00> : vector<2x64xf32>
    %93 = tpu.matmul %91, %92, %cst_40 {dimension_numbers = #tpu.dot_dimension_numbers<[1], [0], [0], [1], [0, 0, 1, 1], [], []>} : vector<2x16xf32>, vector<16x64xf32>, vector<2x64xf32> -> vector<2x64xf32>
    %94 = arith.addf %89, %93 : vector<2x64xf32>
    %95 = vector.extract_strided_slice %81 {offsets = [0, 2, 0], sizes = [2, 1, 16], strides = [1, 1, 1]} : vector<2x4x32xf32> to vector<2x1x16xf32>
    %96 = vector.shape_cast %95 : vector<2x1x16xf32> to vector<2x16xf32>
    %97 = vector.extract_strided_slice %82 {offsets = [32, 0], sizes = [16, 64], strides = [1, 1]} : vector<64x64xf32> to vector<16x64xf32>
    %cst_41 = arith.constant dense<0.000000e+00> : vector<2x64xf32>
    %98 = tpu.matmul %96, %97, %cst_41 {dimension_numbers = #tpu.dot_dimension_numbers<[1], [0], [0], [1], [0, 0, 1, 1], [], []>} : vector<2x16xf32>, vector<16x64xf32>, vector<2x64xf32> -> vector<2x64xf32>
    %99 = arith.addf %94, %98 : vector<2x64xf32>
    %100 = vector.extract_strided_slice %81 {offsets = [0, 3, 0], sizes = [2, 1, 16], strides = [1, 1, 1]} : vector<2x4x32xf32> to vector<2x1x16xf32>
    %101 = vector.shape_cast %100 : vector<2x1x16xf32> to vector<2x16xf32>
    %102 = vector.extract_strided_slice %82 {offsets = [48, 0], sizes = [16, 64], strides = [1, 1]} : vector<64x64xf32> to vector<16x64xf32>
    %cst_42 = arith.constant dense<0.000000e+00> : vector<2x64xf32>
    %103 = tpu.matmul %101, %102, %cst_42 {dimension_numbers = #tpu.dot_dimension_numbers<[1], [0], [0], [1], [0, 0, 1, 1], [], []>} : vector<2x16xf32>, vector<16x64xf32>, vector<2x64xf32> -> vector<2x64xf32>
    %104 = arith.addf %99, %103 : vector<2x64xf32>
    %cst_43 = arith.constant 0.000000e+00 : f32
    %105 = vector.broadcast %cst_43 : f32 to vector<2x16xf32>
    %106 = vector.extract_strided_slice %104 {offsets = [0, 0], sizes = [2, 16], strides = [1, 1]} : vector<2x64xf32> to vector<2x16xf32>
    %107 = vector.extract_strided_slice %81 {offsets = [0, 0, 16], sizes = [2, 1, 16], strides = [1, 1, 1]} : vector<2x4x32xf32> to vector<2x1x16xf32>
    %108 = vector.shape_cast %107 : vector<2x1x16xf32> to vector<2x16xf32>
    %109 = arith.mulf %106, %108 : vector<2x16xf32>
    %110 = arith.addf %105, %109 : vector<2x16xf32>
    %111 = vector.extract_strided_slice %104 {offsets = [0, 16], sizes = [2, 16], strides = [1, 1]} : vector<2x64xf32> to vector<2x16xf32>
    %112 = vector.extract_strided_slice %81 {offsets = [0, 1, 16], sizes = [2, 1, 16], strides = [1, 1, 1]} : vector<2x4x32xf32> to vector<2x1x16xf32>
    %113 = vector.shape_cast %112 : vector<2x1x16xf32> to vector<2x16xf32>
    %114 = arith.mulf %111, %113 : vector<2x16xf32>
    %115 = arith.addf %110, %114 : vector<2x16xf32>
    %116 = vector.extract_strided_slice %104 {offsets = [0, 32], sizes = [2, 16], strides = [1, 1]} : vector<2x64xf32> to vector<2x16xf32>
    %117 = vector.extract_strided_slice %81 {offsets = [0, 2, 16], sizes = [2, 1, 16], strides = [1, 1, 1]} : vector<2x4x32xf32> to vector<2x1x16xf32>
    %118 = vector.shape_cast %117 : vector<2x1x16xf32> to vector<2x16xf32>
    %119 = arith.mulf %116, %118 : vector<2x16xf32>
    %120 = arith.addf %115, %119 : vector<2x16xf32>
    %121 = vector.extract_strided_slice %104 {offsets = [0, 48], sizes = [2, 16], strides = [1, 1]} : vector<2x64xf32> to vector<2x16xf32>
    %122 = vector.extract_strided_slice %81 {offsets = [0, 3, 16], sizes = [2, 1, 16], strides = [1, 1, 1]} : vector<2x4x32xf32> to vector<2x1x16xf32>
    %123 = vector.shape_cast %122 : vector<2x1x16xf32> to vector<2x16xf32>
    %124 = arith.mulf %121, %123 : vector<2x16xf32>
    %125 = arith.addf %120, %124 : vector<2x16xf32>
    %cst_44 = arith.constant dense<0.000000e+00> : vector<2xf32>
    %126 = vector.multi_reduction <add>, %125, %cst_44 [1] : vector<2x16xf32> to vector<2xf32>
    %127 = vector.shape_cast %126 : vector<2xf32> to vector<2x1xf32>
    %128 = vector.broadcast %83 : vector<1x1xf32> to vector<2x1xf32>
    %129 = arith.addf %127, %128 : vector<2x1xf32>
    %c0_45 = arith.constant 0 : index
    %c0_46 = arith.constant 0 : index
    %130 = vector.load %arg3[%c0_45, %c0_46] : memref<2x1xf32, #tpu.memory_space<vmem>>, vector<2x1xf32>
    tpu.vector_store %arg3[%c0_45, %c0_46], %129 {strides = array<i32>} : memref<2x1xf32, #tpu.memory_space<vmem>>, vector<2x1xf32>,
    return
  }
}

</mosaic_0001>

<llo_original>
// kernel: cnn_lstm_forward.1
$region0: #{cnn_lstm_forward.1}
  #allocation0 [shape = 'u32[]', space=smem, size = 0x4, offset = 0x4, fixed_abs, tag = 'smem constant byte address 0x4 - core index']
  #allocation1 [shape = 'u32[144,128]{1,0:T(1,128)}', space=vmem, size = 0x12000, scoped, tag = 'internal scratch']
  #allocation2 [shape = 'f32[2,4,128]{2,1,0:T(4,128)}', space=vmem, size = 0x1000, scoped, tag = 'scratch operand']
  #allocation3 [shape = 'f32[2,4,32]{2,1,0:T(4,128)}', space=vmem, size = 0x1000, scoped, tag = 'scratch operand']
  %s0 = inlined_call_operand.vmem [shape: f32[12,32], index: 0, kind: input, shape index: {}]
  %s1 = inlined_call_operand.vmem [shape: f32[72,128], index: 1, kind: input, shape index: {}]
  %s2 = inlined_call_operand.vmem [shape: f32[80,64], index: 2, kind: input, shape index: {}]
  %s3 = inlined_call_operand.vmem [shape: f32[2,1], index: 3, kind: output, shape index: {}]
  %s4 = sld [smem:[#allocation0]]
  $region22: #{cnn_lstm_forward.1} parent=0
    _
  %s6 = ssub.s32 1, %s4
  %s7 = scalar_select 0, %s6, %s4
  // Predicated region
  $region2: #{cnn_lstm_forward.1} parent=0 // pred_check
    _
  $region3: #{cnn_lstm_forward.1} parent=0 // pred_check_branch
    %9 = sbr.rel (0) target = $region5
  $region4: #{cnn_lstm_forward.1} parent=0 // pred_region
    _
  $region5: #{cnn_lstm_forward.1} parent=0 // pred_fallthru
    _
  // Predicated region
  $region6: #{cnn_lstm_forward.1} parent=0 // pred_check
    _
  $region7: #{cnn_lstm_forward.1} parent=0 // pred_check_branch
    %11 = sbr.rel (0) target = $region9
  $region8: #{cnn_lstm_forward.1} parent=0 // pred_region
    _
  $region9: #{cnn_lstm_forward.1} parent=0 // pred_fallthru
    _
  // Predicated region
  $region10: #{cnn_lstm_forward.1} parent=0 // pred_check
    _
  $region11: #{cnn_lstm_forward.1} parent=0 // pred_check_branch
    %13 = sbr.rel (0) target = $region13
  $region12: #{cnn_lstm_forward.1} parent=0 // pred_region
    _
  $region13: #{cnn_lstm_forward.1} parent=0 // pred_fallthru
    _
  %v14 = vld [vmem:[%s2 + $0x40] sm:$0xff]
  %v15 = vld [vmem:[%s0] sm:$0xff]
  %v16 = vld [vmem:[%s0 + $0x8] sm:$0xf]
  %vm17 = vcmask 97280
  %v19 = vsel %vm17, %v14, 0
  %vm21 = vcmask 1043456
  %v23 = vsel %vm21, %v16, 0
  %25 = vmatprep.subr.mxu0 0.0
  %26 = vmatpush1.msra.mxu0 %v15
  %27 = vmatprep.subr.mxu0 0.0
  %28 = vmatpush1.msra.mxu0 %v23
  %29 = vmatprep.subr.mxu0 0.0
  %30 = vmatpush1.msra.mxu0 0.0
  %31 = vmatprep.subr.mxu0 0.0
  %32 = vmatpush1.msra.mxu0 0.0
  %33 = vmatprep.subr.mxu0 0.0
  %34 = vmatpush1.msra.mxu0 0.0
  %35 = vmatprep.subr.mxu0 0.0
  %36 = vmatpush1.msra.mxu0 0.0
  %37 = vmatprep.subr.mxu0 0.0
  %38 = vmatpush1.msra.mxu0 0.0
  %39 = vmatprep.subr.mxu0 0.0
  %40 = vmatpush1.msra.mxu0 0.0
  %41 = vmatprep.subr.mxu0 0.0
  %42 = vmatpush1.msra.mxu0 0.0
  %43 = vmatprep.subr.mxu0 0.0
  %44 = vmatpush1.msra.mxu0 0.0
  %45 = vmatprep.subr.mxu0 0.0
  %46 = vmatpush1.msra.mxu0 0.0
  %47 = vmatprep.subr.mxu0 0.0
  %48 = vmatpush1.msra.mxu0 0.0
  %49 = vmatprep.subr.mxu0 0.0
  %50 = vmatpush1.msra.mxu0 0.0
  %51 = vmatprep.subr.mxu0 0.0
  %52 = vmatpush1.msra.mxu0 0.0
  %53 = vmatprep.subr.mxu0 0.0
  %54 = vmatpush1.msra.mxu0 0.0
  %55 = vmatprep.subr.mxu0 0.0
  %56 = vmatpush1.msra.mxu0 0.0
  %57 = vmatprep.subr.mxu0 0.0
  %58 = vmatpush1.msra.mxu0 0.0
  %59 = vmatprep.subr.mxu0 0.0
  %60 = vmatpush1.msra.mxu0 0.0
  %61 = vmatprep.subr.mxu0 0.0
  %62 = vmatpush1.msra.mxu0 0.0
  %63 = vmatprep.subr.mxu0 0.0
  %64 = vmatpush1.msra.mxu0 0.0
  %65 = vmatprep.subr.mxu0 0.0
  %66 = vmatpush1.msra.mxu0 0.0
  %67 = vmatprep.subr.mxu0 0.0
  %68 = vmatpush1.msra.mxu0 0.0
  %69 = vmatprep.subr.mxu0 0.0
  %70 = vmatpush1.msra.mxu0 0.0
  %71 = vmatprep.subr.mxu0 0.0
  %72 = vmatpush1.msra.mxu0 0.0
  %73 = vmatprep.subr.mxu0 0.0
  %74 = vmatpush1.msra.mxu0 0.0
  %75 = vmatprep.subr.mxu0 0.0
  %76 = vmatpush1.msra.mxu0 0.0
  %77 = vmatprep.subr.mxu0 0.0
  %78 = vmatpush1.msra.mxu0 0.0
  %79 = vmatprep.subr.mxu0 0.0
  %80 = vmatpush1.msra.mxu0 0.0
  %81 = vmatprep.subr.mxu0 0.0
  %82 = vmatpush1.msra.mxu0 0.0
  %83 = vmatprep.subr.mxu0 0.0
  %84 = vmatpush1.msra.mxu0 0.0
  %85 = vmatprep.subr.mxu0 0.0
  %86 = vmatpush1.msra.mxu0 0.0
  %87 = vmatprep.subr.mxu0 0.0
  %88 = vmatpush1.msra.mxu0 0.0
  %89 = vmatprep.mubr.f32.mxu0 0.0
  %90 = vmatmul.mubr.f32.gmra.mrb[0].mxu0 %v19
  %v91 = vpop.f32.mrb[0].mxu0
  %v92 = vadd.f32 0.0, %v91
  %v93 = vpop.f32.mrb[0].mxu0
  %94 = vdwg.mxu0
  %v95 = vmax.f32 %v92, 0.0
  %v96 = vld [vmem:[%s1] sm:$0xff]
  %v97 = vld [vmem:[%s1 + $0x8] sm:$0xff]
  %v98 = vld [vmem:[%s1 + $0x10] sm:$0xff]
  %v99 = vld [vmem:[%s1 + $0x18] sm:$0xff]
  %v100 = vld [vmem:[%s1 + $0x40] sm:$0x1]
  %v102 = vrot.slane %v95, 4
  %vm103 = vcmask 130048
  %v104 = vsel %vm103, %v102, 0
  %106 = vmatprep.subr.mxu0 0.0
  %107 = vmatpush1.msra.mxu0 %v98
  %108 = vmatprep.subr.mxu0 0.0
  %109 = vmatpush1.msra.mxu0 %v99
  %110 = vmatprep.subr.mxu0 0.0
  %111 = vmatpush1.msra.mxu0 0.0
  %112 = vmatprep.subr.mxu0 0.0
  %113 = vmatpush1.msra.mxu0 0.0
  %114 = vmatprep.subr.mxu0 0.0
  %115 = vmatpush1.msra.mxu0 0.0
  %116 = vmatprep.subr.mxu0 0.0
  %117 = vmatpush1.msra.mxu0 0.0
  %118 = vmatprep.subr.mxu0 0.0
  %119 = vmatpush1.msra.mxu0 0.0
  %120 = vmatprep.subr.mxu0 0.0
  %121 = vmatpush1.msra.mxu0 0.0
  %122 = vmatprep.subr.mxu0 0.0
  %123 = vmatpush1.msra.mxu0 0.0
  %124 = vmatprep.subr.mxu0 0.0
  %125 = vmatpush1.msra.mxu0 0.0
  %126 = vmatprep.subr.mxu0 0.0
  %127 = vmatpush1.msra.mxu0 0.0
  %128 = vmatprep.subr.mxu0 0.0
  %129 = vmatpush1.msra.mxu0 0.0
  %130 = vmatprep.subr.mxu0 0.0
  %131 = vmatpush1.msra.mxu0 0.0
  %132 = vmatprep.subr.mxu0 0.0
  %133 = vmatpush1.msra.mxu0 0.0
  %134 = vmatprep.subr.mxu0 0.0
  %135 = vmatpush1.msra.mxu0 0.0
  %136 = vmatprep.subr.mxu0 0.0
  %137 = vmatpush1.msra.mxu0 0.0
  %138 = vmatprep.subr.mxu0 0.0
  %139 = vmatpush1.msra.mxu0 0.0
  %140 = vmatprep.subr.mxu0 0.0
  %141 = vmatpush1.msra.mxu0 0.0
  %142 = vmatprep.subr.mxu0 0.0
  %143 = vmatpush1.msra.mxu0 0.0
  %144 = vmatprep.subr.mxu0 0.0
  %145 = vmatpush1.msra.mxu0 0.0
  %146 = vmatprep.subr.mxu0 0.0
  %147 = vmatpush1.msra.mxu0 0.0
  %148 = vmatprep.subr.mxu0 0.0
  %149 = vmatpush1.msra.mxu0 0.0
  %150 = vmatprep.subr.mxu0 0.0
  %151 = vmatpush1.msra.mxu0 0.0
  %152 = vmatprep.subr.mxu0 0.0
  %153 = vmatpush1.msra.mxu0 0.0
  %154 = vmatprep.subr.mxu0 0.0
  %155 = vmatpush1.msra.mxu0 0.0
  %156 = vmatprep.subr.mxu0 0.0
  %157 = vmatpush1.msra.mxu0 0.0
  %158 = vmatprep.subr.mxu0 0.0
  %159 = vmatpush1.msra.mxu0 0.0
  %160 = vmatprep.subr.mxu0 0.0
  %161 = vmatpush1.msra.mxu0 0.0
  %162 = vmatprep.subr.mxu0 0.0
  %163 = vmatpush1.msra.mxu0 0.0
  %164 = vmatprep.subr.mxu0 0.0
  %165 = vmatpush1.msra.mxu0 0.0
  %166 = vmatprep.subr.mxu0 0.0
  %167 = vmatpush1.msra.mxu0 0.0
  %168 = vmatprep.subr.mxu0 0.0
  %169 = vmatpush1.msra.mxu0 0.0
  %170 = vmatprep.mubr.f32.mxu0 0.0
  %171 = vmatmul.mubr.f32.gmra.mrb[0].mxu0 %v104
  %v172 = vpop.f32.mrb[0].mxu0
  %v173 = vadd.f32 0.0, %v172
  %v174 = vpop.f32.mrb[0].mxu0
  %175 = vdwg.mxu0
  %v176 = vsel %vm103, %v95, 0
  %178 = vmatprep.subr.mxu0 0.0
  %179 = vmatpush1.msra.mxu0 %v96
  %180 = vmatprep.subr.mxu0 0.0
  %181 = vmatpush1.msra.mxu0 %v97
  %182 = vmatprep.subr.mxu0 0.0
  %183 = vmatpush1.msra.mxu0 0.0
  %184 = vmatprep.subr.mxu0 0.0
  %185 = vmatpush1.msra.mxu0 0.0
  %186 = vmatprep.subr.mxu0 0.0
  %187 = vmatpush1.msra.mxu0 0.0
  %188 = vmatprep.subr.mxu0 0.0
  %189 = vmatpush1.msra.mxu0 0.0
  %190 = vmatprep.subr.mxu0 0.0
  %191 = vmatpush1.msra.mxu0 0.0
  %192 = vmatprep.subr.mxu0 0.0
  %193 = vmatpush1.msra.mxu0 0.0
  %194 = vmatprep.subr.mxu0 0.0
  %195 = vmatpush1.msra.mxu0 0.0
  %196 = vmatprep.subr.mxu0 0.0
  %197 = vmatpush1.msra.mxu0 0.0
  %198 = vmatprep.subr.mxu0 0.0
  %199 = vmatpush1.msra.mxu0 0.0
  %200 = vmatprep.subr.mxu0 0.0
  %201 = vmatpush1.msra.mxu0 0.0
  %202 = vmatprep.subr.mxu0 0.0
  %203 = vmatpush1.msra.mxu0 0.0
  %204 = vmatprep.subr.mxu0 0.0
  %205 = vmatpush1.msra.mxu0 0.0
  %206 = vmatprep.subr.mxu0 0.0
  %207 = vmatpush1.msra.mxu0 0.0
  %208 = vmatprep.subr.mxu0 0.0
  %209 = vmatpush1.msra.mxu0 0.0
  %210 = vmatprep.subr.mxu0 0.0
  %211 = vmatpush1.msra.mxu0 0.0
  %212 = vmatprep.subr.mxu0 0.0
  %213 = vmatpush1.msra.mxu0 0.0
  %214 = vmatprep.subr.mxu0 0.0
  %215 = vmatpush1.msra.mxu0 0.0
  %216 = vmatprep.subr.mxu0 0.0
  %217 = vmatpush1.msra.mxu0 0.0
  %218 = vmatprep.subr.mxu0 0.0
  %219 = vmatpush1.msra.mxu0 0.0
  %220 = vmatprep.subr.mxu0 0.0
  %221 = vmatpush1.msra.mxu0 0.0
  %222 = vmatprep.subr.mxu0 0.0
  %223 = vmatpush1.msra.mxu0 0.0
  %224 = vmatprep.subr.mxu0 0.0
  %225 = vmatpush1.msra.mxu0 0.0
  %226 = vmatprep.subr.mxu0 0.0
  %227 = vmatpush1.msra.mxu0 0.0
  %228 = vmatprep.subr.mxu0 0.0
  %229 = vmatpush1.msra.mxu0 0.0
  %230 = vmatprep.subr.mxu0 0.0
  %231 = vmatpush1.msra.mxu0 0.0
  %232 = vmatprep.subr.mxu0 0.0
  %233 = vmatpush1.msra.mxu0 0.0
  %234 = vmatprep.subr.mxu0 0.0
  %235 = vmatpush1.msra.mxu0 0.0
  %236 = vmatprep.subr.mxu0 0.0
  %237 = vmatpush1.msra.mxu0 0.0
  %238 = vmatprep.subr.mxu0 0.0
  %239 = vmatpush1.msra.mxu0 0.0
  %240 = vmatprep.subr.mxu0 0.0
  %241 = vmatpush1.msra.mxu0 0.0
  %242 = vmatprep.mubr.f32.mxu0 0.0
  %243 = vmatmul.mubr.f32.gmra.mrb[0].mxu0 %v176
  %v244 = vpop.f32.mrb[0].mxu0
  %v245 = vadd.f32 %v173, %v244
  %v246 = vpop.f32.mrb[0].mxu0
  %247 = vdwg.mxu0
  %v248 = vlaneseq
  %v249 = vshrl.u32 %v248, 7
  %v250 = vsub.s32 0, %v249
  %v251 = vrot.slane %v100, %v250
  %v252 = vadd.f32 %v245, %v251
  %253 = vst [vmem:[#allocation2] sm:$0xf] %v252
  %254 = vrot.lane.b32.xlu0 %v102, 112
  %v255 = vpop.permute.xlu0 %254
  %v256 = vsel %vm103, %v255, 0
  %258 = vmatprep.subr.mxu0 0.0
  %259 = vmatpush1.msra.mxu0 %v98
  %260 = vmatprep.subr.mxu0 0.0
  %261 = vmatpush1.msra.mxu0 %v99
  %262 = vmatprep.subr.mxu0 0.0
  %263 = vmatpush1.msra.mxu0 0.0
  %264 = vmatprep.subr.mxu0 0.0
  %265 = vmatpush1.msra.mxu0 0.0
  %266 = vmatprep.subr.mxu0 0.0
  %267 = vmatpush1.msra.mxu0 0.0
  %268 = vmatprep.subr.mxu0 0.0
  %269 = vmatpush1.msra.mxu0 0.0
  %270 = vmatprep.subr.mxu0 0.0
  %271 = vmatpush1.msra.mxu0 0.0
  %272 = vmatprep.subr.mxu0 0.0
  %273 = vmatpush1.msra.mxu0 0.0
  %274 = vmatprep.subr.mxu0 0.0
  %275 = vmatpush1.msra.mxu0 0.0
  %276 = vmatprep.subr.mxu0 0.0
  %277 = vmatpush1.msra.mxu0 0.0
  %278 = vmatprep.subr.mxu0 0.0
  %279 = vmatpush1.msra.mxu0 0.0
  %280 = vmatprep.subr.mxu0 0.0
  %281 = vmatpush1.msra.mxu0 0.0
  %282 = vmatprep.subr.mxu0 0.0
  %283 = vmatpush1.msra.mxu0 0.0
  %284 = vmatprep.subr.mxu0 0.0
  %285 = vmatpush1.msra.mxu0 0.0
  %286 = vmatprep.subr.mxu0 0.0
  %287 = vmatpush1.msra.mxu0 0.0
  %288 = vmatprep.subr.mxu0 0.0
  %289 = vmatpush1.msra.mxu0 0.0
  %290 = vmatprep.subr.mxu0 0.0
  %291 = vmatpush1.msra.mxu0 0.0
  %292 = vmatprep.subr.mxu0 0.0
  %293 = vmatpush1.msra.mxu0 0.0
  %294 = vmatprep.subr.mxu0 0.0
  %295 = vmatpush1.msra.mxu0 0.0
  %296 = vmatprep.subr.mxu0 0.0
  %297 = vmatpush1.msra.mxu0 0.0
  %298 = vmatprep.subr.mxu0 0.0
  %299 = vmatpush1.msra.mxu0 0.0
  %300 = vmatprep.subr.mxu0 0.0
  %301 = vmatpush1.msra.mxu0 0.0
  %302 = vmatprep.subr.mxu0 0.0
  %303 = vmatpush1.msra.mxu0 0.0
  %304 = vmatprep.subr.mxu0 0.0
  %305 = vmatpush1.msra.mxu0 0.0
  %306 = vmatprep.subr.mxu0 0.0
  %307 = vmatpush1.msra.mxu0 0.0
  %308 = vmatprep.subr.mxu0 0.0
  %309 = vmatpush1.msra.mxu0 0.0
  %310 = vmatprep.subr.mxu0 0.0
  %311 = vmatpush1.msra.mxu0 0.0
  %312 = vmatprep.subr.mxu0 0.0
  %313 = vmatpush1.msra.mxu0 0.0
  %314 = vmatprep.subr.mxu0 0.0
  %315 = vmatpush1.msra.mxu0 0.0
  %316 = vmatprep.subr.mxu0 0.0
  %317 = vmatpush1.msra.mxu0 0.0
  %318 = vmatprep.subr.mxu0 0.0
  %319 = vmatpush1.msra.mxu0 0.0
  %320 = vmatprep.subr.mxu0 0.0
  %321 = vmatpush1.msra.mxu0 0.0
  %322 = vmatprep.mubr.f32.mxu0 0.0
  %323 = vmatmul.mubr.f32.gmra.mrb[0].mxu0 %v256
  %v324 = vpop.f32.mrb[0].mxu0
  %v325 = vadd.f32 0.0, %v324
  %v326 = vpop.f32.mrb[0].mxu0
  %327 = vdwg.mxu0
  %328 = vrot.lane.b32.xlu0 %v95, 112
  %v329 = vpop.permute.xlu0 %328
  %v330 = vsel %vm103, %v329, 0
  %332 = vmatprep.subr.mxu0 0.0
  %333 = vmatpush1.msra.mxu0 %v96
  %334 = vmatprep.subr.mxu0 0.0
  %335 = vmatpush1.msra.mxu0 %v97
  %336 = vmatprep.subr.mxu0 0.0
  %337 = vmatpush1.msra.mxu0 0.0
  %338 = vmatprep.subr.mxu0 0.0
  %339 = vmatpush1.msra.mxu0 0.0
  %340 = vmatprep.subr.mxu0 0.0
  %341 = vmatpush1.msra.mxu0 0.0
  %342 = vmatprep.subr.mxu0 0.0
  %343 = vmatpush1.msra.mxu0 0.0
  %344 = vmatprep.subr.mxu0 0.0
  %345 = vmatpush1.msra.mxu0 0.0
  %346 = vmatprep.subr.mxu0 0.0
  %347 = vmatpush1.msra.mxu0 0.0
  %348 = vmatprep.subr.mxu0 0.0
  %349 = vmatpush1.msra.mxu0 0.0
  %350 = vmatprep.subr.mxu0 0.0
  %351 = vmatpush1.msra.mxu0 0.0
  %352 = vmatprep.subr.mxu0 0.0
  %353 = vmatpush1.msra.mxu0 0.0
  %354 = vmatprep.subr.mxu0 0.0
  %355 = vmatpush1.msra.mxu0 0.0
  %356 = vmatprep.subr.mxu0 0.0
  %357 = vmatpush1.msra.mxu0 0.0
  %358 = vmatprep.subr.mxu0 0.0
  %359 = vmatpush1.msra.mxu0 0.0
  %360 = vmatprep.subr.mxu0 0.0
  %361 = vmatpush1.msra.mxu0 0.0
  %362 = vmatprep.subr.mxu0 0.0
  %363 = vmatpush1.msra.mxu0 0.0
  %364 = vmatprep.subr.mxu0 0.0
  %365 = vmatpush1.msra.mxu0 0.0
  %366 = vmatprep.subr.mxu0 0.0
  %367 = vmatpush1.msra.mxu0 0.0
  %368 = vmatprep.subr.mxu0 0.0
  %369 = vmatpush1.msra.mxu0 0.0
  %370 = vmatprep.subr.mxu0 0.0
  %371 = vmatpush1.msra.mxu0 0.0
  %372 = vmatprep.subr.mxu0 0.0
  %373 = vmatpush1.msra.mxu0 0.0
  %374 = vmatprep.subr.mxu0 0.0
  %375 = vmatpush1.msra.mxu0 0.0
  %376 = vmatprep.subr.mxu0 0.0
  %377 = vmatpush1.msra.mxu0 0.0
  %378 = vmatprep.subr.mxu0 0.0
  %379 = vmatpush1.msra.mxu0 0.0
  %380 = vmatprep.subr.mxu0 0.0
  %381 = vmatpush1.msra.mxu0 0.0
  %382 = vmatprep.subr.mxu0 0.0
  %383 = vmatpush1.msra.mxu0 0.0
  %384 = vmatprep.subr.mxu0 0.0
  %385 = vmatpush1.msra.mxu0 0.0
  %386 = vmatprep.subr.mxu0 0.0
  %387 = vmatpush1.msra.mxu0 0.0
  %388 = vmatprep.subr.mxu0 0.0
  %389 = vmatpush1.msra.mxu0 0.0
  %390 = vmatprep.subr.mxu0 0.0
  %391 = vmatpush1.msra.mxu0 0.0
  %392 = vmatprep.subr.mxu0 0.0
  %393 = vmatpush1.msra.mxu0 0.0
  %394 = vmatprep.subr.mxu0 0.0
  %395 = vmatpush1.msra.mxu0 0.0
  %396 = vmatprep.mubr.f32.mxu0 0.0
  %397 = vmatmul.mubr.f32.gmra.mrb[0].mxu0 %v330
  %v398 = vpop.f32.mrb[0].mxu0
  %v399 = vadd.f32 %v325, %v398
  %v400 = vpop.f32.mrb[0].mxu0
  %401 = vdwg.mxu0
  %v402 = vadd.f32 %v399, %v251
  %s403 = scalar_lea.vmem [#allocation2], 4
  %404 = vst [vmem:[%s403] sm:$0xf] %v402
  %v405 = vld [vmem:[%s1 + $0x20] sm:$0xff]
  %v406 = vld [vmem:[%s1 + $0x28] sm:$0xff]
  %v407 = vld [vmem:[%s1 + $0x30] sm:$0xff]
  %v408 = vld [vmem:[%s1 + $0x38] sm:$0xff]
  %v409 = vld [vmem:[#allocation2] sm:$0xf]
  %vm410 = vcmask 261120
  %v412 = vsel %vm410, 0.0, 0
  %414 = vmatprep.subr.mxu0 0.0
  %415 = vmatpush1.msra.mxu0 %v405
  %416 = vmatprep.subr.mxu0 0.0
  %417 = vmatpush1.msra.mxu0 %v406
  %418 = vmatprep.subr.mxu0 0.0
  %419 = vmatpush1.msra.mxu0 %v407
  %420 = vmatprep.subr.mxu0 0.0
  %421 = vmatpush1.msra.mxu0 %v408
  %422 = vmatprep.subr.mxu0 0.0
  %423 = vmatpush1.msra.mxu0 0.0
  %424 = vmatprep.subr.mxu0 0.0
  %425 = vmatpush1.msra.mxu0 0.0
  %426 = vmatprep.subr.mxu0 0.0
  %427 = vmatpush1.msra.mxu0 0.0
  %428 = vmatprep.subr.mxu0 0.0
  %429 = vmatpush1.msra.mxu0 0.0
  %430 = vmatprep.subr.mxu0 0.0
  %431 = vmatpush1.msra.mxu0 0.0
  %432 = vmatprep.subr.mxu0 0.0
  %433 = vmatpush1.msra.mxu0 0.0
  %434 = vmatprep.subr.mxu0 0.0
  %435 = vmatpush1.msra.mxu0 0.0
  %436 = vmatprep.subr.mxu0 0.0
  %437 = vmatpush1.msra.mxu0 0.0
  %438 = vmatprep.subr.mxu0 0.0
  %439 = vmatpush1.msra.mxu0 0.0
  %440 = vmatprep.subr.mxu0 0.0
  %441 = vmatpush1.msra.mxu0 0.0
  %442 = vmatprep.subr.mxu0 0.0
  %443 = vmatpush1.msra.mxu0 0.0
  %444 = vmatprep.subr.mxu0 0.0
  %445 = vmatpush1.msra.mxu0 0.0
  %446 = vmatprep.subr.mxu0 0.0
  %447 = vmatpush1.msra.mxu0 0.0
  %448 = vmatprep.subr.mxu0 0.0
  %449 = vmatpush1.msra.mxu0 0.0
  %450 = vmatprep.subr.mxu0 0.0
  %451 = vmatpush1.msra.mxu0 0.0
  %452 = vmatprep.subr.mxu0 0.0
  %453 = vmatpush1.msra.mxu0 0.0
  %454 = vmatprep.subr.mxu0 0.0
  %455 = vmatpush1.msra.mxu0 0.0
  %456 = vmatprep.subr.mxu0 0.0
  %457 = vmatpush1.msra.mxu0 0.0
  %458 = vmatprep.subr.mxu0 0.0
  %459 = vmatpush1.msra.mxu0 0.0
  %460 = vmatprep.subr.mxu0 0.0
  %461 = vmatpush1.msra.mxu0 0.0
  %462 = vmatprep.subr.mxu0 0.0
  %463 = vmatpush1.msra.mxu0 0.0
  %464 = vmatprep.subr.mxu0 0.0
  %465 = vmatpush1.msra.mxu0 0.0
  %466 = vmatprep.subr.mxu0 0.0
  %467 = vmatpush1.msra.mxu0 0.0
  %468 = vmatprep.subr.mxu0 0.0
  %469 = vmatpush1.msra.mxu0 0.0
  %470 = vmatprep.subr.mxu0 0.0
  %471 = vmatpush1.msra.mxu0 0.0
  %472 = vmatprep.subr.mxu0 0.0
  %473 = vmatpush1.msra.mxu0 0.0
  %474 = vmatprep.subr.mxu0 0.0
  %475 = vmatpush1.msra.mxu0 0.0
  %476 = vmatprep.subr.mxu0 0.0
  %477 = vmatpush1.msra.mxu0 0.0
  %478 = vmatprep.mubr.f32.mxu0 0.0
  %479 = vmatmul.mubr.f32.gmra.mrb[0].mxu0 %v412
  %v480 = vpop.f32.mrb[0].mxu0
  %v481 = vadd.f32 %v409, %v480
  %v482 = vpop.f32.mrb[0].mxu0
  %483 = vdwg.mxu0
  %v484 = vxor.u32 %v481, 2147483648
  %v485 = vmul.f32 %v484, 1.442695
  %v486 = vpow.pop %v485
  %v487 = vadd.f32 %v486, 1.0
  %v488 = vrcp.pop %v487
  %v489 = vmul.f32 1.0, %v488
  %v490 = vtanh.pop %v481
  %v491 = vmul.f32 %v489, 0.0
  %493 = vrot.lane.b32.xlu0 %v490, 32
  %v494 = vpop.permute.xlu0 %493
  %v496 = vmul.f32 %v489, %v494
  %498 = vrot.lane.b32.xlu0 %v496, 32
  %v499 = vpop.permute.xlu0 %498
  %v501 = vadd.f32 %v491, %v499
  %v502 = vtanh.pop %v501
  %504 = vrot.lane.b32.xlu0 %v502, 32
  %v505 = vpop.permute.xlu0 %504
  %v507 = vmul.f32 %v489, %v505
  %509 = vrot.lane.b32.xlu0 %v507, 64
  %v510 = vpop.permute.xlu0 %509
  %vm512 = vcmask 257024
  %513 = vst.msk [vmem:[#allocation3] sm:$0xf] %vm512, %v510
  %v514 = vld [vmem:[%s403] sm:$0xf]
  %v515 = vsel %vm410, %v510, 0
  %517 = vmatprep.subr.mxu0 0.0
  %518 = vmatpush1.msra.mxu0 %v405
  %519 = vmatprep.subr.mxu0 0.0
  %520 = vmatpush1.msra.mxu0 %v406
  %521 = vmatprep.subr.mxu0 0.0
  %522 = vmatpush1.msra.mxu0 %v407
  %523 = vmatprep.subr.mxu0 0.0
  %524 = vmatpush1.msra.mxu0 %v408
  %525 = vmatprep.subr.mxu0 0.0
  %526 = vmatpush1.msra.mxu0 0.0
  %527 = vmatprep.subr.mxu0 0.0
  %528 = vmatpush1.msra.mxu0 0.0
  %529 = vmatprep.subr.mxu0 0.0
  %530 = vmatpush1.msra.mxu0 0.0
  %531 = vmatprep.subr.mxu0 0.0
  %532 = vmatpush1.msra.mxu0 0.0
  %533 = vmatprep.subr.mxu0 0.0
  %534 = vmatpush1.msra.mxu0 0.0
  %535 = vmatprep.subr.mxu0 0.0
  %536 = vmatpush1.msra.mxu0 0.0
  %537 = vmatprep.subr.mxu0 0.0
  %538 = vmatpush1.msra.mxu0 0.0
  %539 = vmatprep.subr.mxu0 0.0
  %540 = vmatpush1.msra.mxu0 0.0
  %541 = vmatprep.subr.mxu0 0.0
  %542 = vmatpush1.msra.mxu0 0.0
  %543 = vmatprep.subr.mxu0 0.0
  %544 = vmatpush1.msra.mxu0 0.0
  %545 = vmatprep.subr.mxu0 0.0
  %546 = vmatpush1.msra.mxu0 0.0
  %547 = vmatprep.subr.mxu0 0.0
  %548 = vmatpush1.msra.mxu0 0.0
  %549 = vmatprep.subr.mxu0 0.0
  %550 = vmatpush1.msra.mxu0 0.0
  %551 = vmatprep.subr.mxu0 0.0
  %552 = vmatpush1.msra.mxu0 0.0
  %553 = vmatprep.subr.mxu0 0.0
  %554 = vmatpush1.msra.mxu0 0.0
  %555 = vmatprep.subr.mxu0 0.0
  %556 = vmatpush1.msra.mxu0 0.0
  %557 = vmatprep.subr.mxu0 0.0
  %558 = vmatpush1.msra.mxu0 0.0
  %559 = vmatprep.subr.mxu0 0.0
  %560 = vmatpush1.msra.mxu0 0.0
  %561 = vmatprep.subr.mxu0 0.0
  %562 = vmatpush1.msra.mxu0 0.0
  %563 = vmatprep.subr.mxu0 0.0
  %564 = vmatpush1.msra.mxu0 0.0
  %565 = vmatprep.subr.mxu0 0.0
  %566 = vmatpush1.msra.mxu0 0.0
  %567 = vmatprep.subr.mxu0 0.0
  %568 = vmatpush1.msra.mxu0 0.0
  %569 = vmatprep.subr.mxu0 0.0
  %570 = vmatpush1.msra.mxu0 0.0
  %571 = vmatprep.subr.mxu0 0.0
  %572 = vmatpush1.msra.mxu0 0.0
  %573 = vmatprep.subr.mxu0 0.0
  %574 = vmatpush1.msra.mxu0 0.0
  %575 = vmatprep.subr.mxu0 0.0
  %576 = vmatpush1.msra.mxu0 0.0
  %577 = vmatprep.subr.mxu0 0.0
  %578 = vmatpush1.msra.mxu0 0.0
  %579 = vmatprep.subr.mxu0 0.0
  %580 = vmatpush1.msra.mxu0 0.0
  %581 = vmatprep.mubr.f32.mxu0 0.0
  %582 = vmatmul.mubr.f32.gmra.mrb[0].mxu0 %v515
  %v583 = vpop.f32.mrb[0].mxu0
  %v584 = vadd.f32 %v514, %v583
  %v585 = vpop.f32.mrb[0].mxu0
  %586 = vdwg.mxu0
  %v587 = vxor.u32 %v584, 2147483648
  %v588 = vmul.f32 %v587, 1.442695
  %v589 = vpow.pop %v588
  %v590 = vadd.f32 %v589, 1.0
  %v591 = vrcp.pop %v590
  %v592 = vmul.f32 1.0, %v591
  %v593 = vtanh.pop %v584
  %v594 = vmul.f32 %v592, %v501
  %596 = vrot.lane.b32.xlu0 %v593, 32
  %v597 = vpop.permute.xlu0 %596
  %v599 = vmul.f32 %v592, %v597
  %601 = vrot.lane.b32.xlu0 %v599, 32
  %v602 = vpop.permute.xlu0 %601
  %v604 = vadd.f32 %v594, %v602
  %v605 = vtanh.pop %v604
  %607 = vrot.lane.b32.xlu0 %v605, 32
  %v608 = vpop.permute.xlu0 %607
  %v610 = vmul.f32 %v592, %v608
  %612 = vrot.lane.b32.xlu0 %v610, 64
  %v613 = vpop.permute.xlu0 %612
  %s615 = scalar_lea.vmem [#allocation3], 4
  %616 = vst.msk [vmem:[%s615] sm:$0xf] %vm512, %v613
  %v617 = vld [vmem:[#allocation3] sm:$0xf]
  %v618 = vld [vmem:[#allocation3 + $0x4] sm:$0xf]
  %v619 = vld [vmem:[%s2] sm:$0xff]
  %v620 = vld [vmem:[%s2 + $0x8] sm:$0xff]
  %v621 = vld [vmem:[%s2 + $0x10] sm:$0xff]
  %v622 = vld [vmem:[%s2 + $0x18] sm:$0xff]
  %v623 = vld [vmem:[%s2 + $0x20] sm:$0xff]
  %v624 = vld [vmem:[%s2 + $0x28] sm:$0xff]
  %v625 = vld [vmem:[%s2 + $0x30] sm:$0xff]
  %v626 = vld [vmem:[%s2 + $0x38] sm:$0xff]
  %v627 = vld [vmem:[%s2 + $0x48] sm:$0x1]
  %v630 = vrot.slane %v617, 1
  %vm631 = vcmask 1041409
  %v632 = vsel %vm631, %v618, %v630
  %v633 = vsel %vm103, %v632, 0
  %635 = vmatprep.subr.mxu0 0.0
  %636 = vmatpush1.msra.mxu0 %v621
  %637 = vmatprep.subr.mxu0 0.0
  %638 = vmatpush1.msra.mxu0 %v622
  %639 = vmatprep.subr.mxu0 0.0
  %640 = vmatpush1.msra.mxu0 0.0
  %641 = vmatprep.subr.mxu0 0.0
  %642 = vmatpush1.msra.mxu0 0.0
  %643 = vmatprep.subr.mxu0 0.0
  %644 = vmatpush1.msra.mxu0 0.0
  %645 = vmatprep.subr.mxu0 0.0
  %646 = vmatpush1.msra.mxu0 0.0
  %647 = vmatprep.subr.mxu0 0.0
  %648 = vmatpush1.msra.mxu0 0.0
  %649 = vmatprep.subr.mxu0 0.0
  %650 = vmatpush1.msra.mxu0 0.0
  %651 = vmatprep.subr.mxu0 0.0
  %652 = vmatpush1.msra.mxu0 0.0
  %653 = vmatprep.subr.mxu0 0.0
  %654 = vmatpush1.msra.mxu0 0.0
  %655 = vmatprep.subr.mxu0 0.0
  %656 = vmatpush1.msra.mxu0 0.0
  %657 = vmatprep.subr.mxu0 0.0
  %658 = vmatpush1.msra.mxu0 0.0
  %659 = vmatprep.subr.mxu0 0.0
  %660 = vmatpush1.msra.mxu0 0.0
  %661 = vmatprep.subr.mxu0 0.0
  %662 = vmatpush1.msra.mxu0 0.0
  %663 = vmatprep.subr.mxu0 0.0
  %664 = vmatpush1.msra.mxu0 0.0
  %665 = vmatprep.subr.mxu0 0.0
  %666 = vmatpush1.msra.mxu0 0.0
  %667 = vmatprep.subr.mxu0 0.0
  %668 = vmatpush1.msra.mxu0 0.0
  %669 = vmatprep.subr.mxu0 0.0
  %670 = vmatpush1.msra.mxu0 0.0
  %671 = vmatprep.subr.mxu0 0.0
  %672 = vmatpush1.msra.mxu0 0.0
  %673 = vmatprep.subr.mxu0 0.0
  %674 = vmatpush1.msra.mxu0 0.0
  %675 = vmatprep.subr.mxu0 0.0
  %676 = vmatpush1.msra.mxu0 0.0
  %677 = vmatprep.subr.mxu0 0.0
  %678 = vmatpush1.msra.mxu0 0.0
  %679 = vmatprep.subr.mxu0 0.0
  %680 = vmatpush1.msra.mxu0 0.0
  %681 = vmatprep.subr.mxu0 0.0
  %682 = vmatpush1.msra.mxu0 0.0
  %683 = vmatprep.subr.mxu0 0.0
  %684 = vmatpush1.msra.mxu0 0.0
  %685 = vmatprep.subr.mxu0 0.0
  %686 = vmatpush1.msra.mxu0 0.0
  %687 = vmatprep.subr.mxu0 0.0
  %688 = vmatpush1.msra.mxu0 0.0
  %689 = vmatprep.subr.mxu0 0.0
  %690 = vmatpush1.msra.mxu0 0.0
  %691 = vmatprep.subr.mxu0 0.0
  %692 = vmatpush1.msra.mxu0 0.0
  %693 = vmatprep.subr.mxu0 0.0
  %694 = vmatpush1.msra.mxu0 0.0
  %695 = vmatprep.subr.mxu0 0.0
  %696 = vmatpush1.msra.mxu0 0.0
  %697 = vmatprep.subr.mxu0 0.0
  %698 = vmatpush1.msra.mxu0 0.0
  %699 = vmatprep.mubr.f32.mxu0 0.0
  %700 = vmatmul.mubr.f32.gmra.mrb[0].mxu0 %v633
  %v701 = vpop.f32.mrb[0].mxu0
  %v702 = vadd.f32 0.0, %v701
  %v703 = vpop.f32.mrb[0].mxu0
  %704 = vdwg.mxu0
  %v705 = vrot.slane %v618, 7
  %v706 = vsel %vm631, %v705, %v617
  %v707 = vsel %vm103, %v706, 0
  %709 = vmatprep.subr.mxu0 0.0
  %710 = vmatpush1.msra.mxu0 %v619
  %711 = vmatprep.subr.mxu0 0.0
  %712 = vmatpush1.msra.mxu0 %v620
  %713 = vmatprep.subr.mxu0 0.0
  %714 = vmatpush1.msra.mxu0 0.0
  %715 = vmatprep.subr.mxu0 0.0
  %716 = vmatpush1.msra.mxu0 0.0
  %717 = vmatprep.subr.mxu0 0.0
  %718 = vmatpush1.msra.mxu0 0.0
  %719 = vmatprep.subr.mxu0 0.0
  %720 = vmatpush1.msra.mxu0 0.0
  %721 = vmatprep.subr.mxu0 0.0
  %722 = vmatpush1.msra.mxu0 0.0
  %723 = vmatprep.subr.mxu0 0.0
  %724 = vmatpush1.msra.mxu0 0.0
  %725 = vmatprep.subr.mxu0 0.0
  %726 = vmatpush1.msra.mxu0 0.0
  %727 = vmatprep.subr.mxu0 0.0
  %728 = vmatpush1.msra.mxu0 0.0
  %729 = vmatprep.subr.mxu0 0.0
  %730 = vmatpush1.msra.mxu0 0.0
  %731 = vmatprep.subr.mxu0 0.0
  %732 = vmatpush1.msra.mxu0 0.0
  %733 = vmatprep.subr.mxu0 0.0
  %734 = vmatpush1.msra.mxu0 0.0
  %735 = vmatprep.subr.mxu0 0.0
  %736 = vmatpush1.msra.mxu0 0.0
  %737 = vmatprep.subr.mxu0 0.0
  %738 = vmatpush1.msra.mxu0 0.0
  %739 = vmatprep.subr.mxu0 0.0
  %740 = vmatpush1.msra.mxu0 0.0
  %741 = vmatprep.subr.mxu0 0.0
  %742 = vmatpush1.msra.mxu0 0.0
  %743 = vmatprep.subr.mxu0 0.0
  %744 = vmatpush1.msra.mxu0 0.0
  %745 = vmatprep.subr.mxu0 0.0
  %746 = vmatpush1.msra.mxu0 0.0
  %747 = vmatprep.subr.mxu0 0.0
  %748 = vmatpush1.msra.mxu0 0.0
  %749 = vmatprep.subr.mxu0 0.0
  %750 = vmatpush1.msra.mxu0 0.0
  %751 = vmatprep.subr.mxu0 0.0
  %752 = vmatpush1.msra.mxu0 0.0
  %753 = vmatprep.subr.mxu0 0.0
  %754 = vmatpush1.msra.mxu0 0.0
  %755 = vmatprep.subr.mxu0 0.0
  %756 = vmatpush1.msra.mxu0 0.0
  %757 = vmatprep.subr.mxu0 0.0
  %758 = vmatpush1.msra.mxu0 0.0
  %759 = vmatprep.subr.mxu0 0.0
  %760 = vmatpush1.msra.mxu0 0.0
  %761 = vmatprep.subr.mxu0 0.0
  %762 = vmatpush1.msra.mxu0 0.0
  %763 = vmatprep.subr.mxu0 0.0
  %764 = vmatpush1.msra.mxu0 0.0
  %765 = vmatprep.subr.mxu0 0.0
  %766 = vmatpush1.msra.mxu0 0.0
  %767 = vmatprep.subr.mxu0 0.0
  %768 = vmatpush1.msra.mxu0 0.0
  %769 = vmatprep.subr.mxu0 0.0
  %770 = vmatpush1.msra.mxu0 0.0
  %771 = vmatprep.subr.mxu0 0.0
  %772 = vmatpush1.msra.mxu0 0.0
  %773 = vmatprep.mubr.f32.mxu0 0.0
  %774 = vmatmul.mubr.f32.gmra.mrb[0].mxu0 %v707
  %v775 = vpop.f32.mrb[0].mxu0
  %v776 = vadd.f32 %v702, %v775
  %v777 = vpop.f32.mrb[0].mxu0
  %778 = vdwg.mxu0
  %v779 = vrot.slane %v617, 2
  %v780 = vrot.slane %v618, 1
  %v781 = vsel %vm631, %v780, %v779
  %v782 = vsel %vm103, %v781, 0
  %784 = vmatprep.subr.mxu0 0.0
  %785 = vmatpush1.msra.mxu0 %v623
  %786 = vmatprep.subr.mxu0 0.0
  %787 = vmatpush1.msra.mxu0 %v624
  %788 = vmatprep.subr.mxu0 0.0
  %789 = vmatpush1.msra.mxu0 0.0
  %790 = vmatprep.subr.mxu0 0.0
  %791 = vmatpush1.msra.mxu0 0.0
  %792 = vmatprep.subr.mxu0 0.0
  %793 = vmatpush1.msra.mxu0 0.0
  %794 = vmatprep.subr.mxu0 0.0
  %795 = vmatpush1.msra.mxu0 0.0
  %796 = vmatprep.subr.mxu0 0.0
  %797 = vmatpush1.msra.mxu0 0.0
  %798 = vmatprep.subr.mxu0 0.0
  %799 = vmatpush1.msra.mxu0 0.0
  %800 = vmatprep.subr.mxu0 0.0
  %801 = vmatpush1.msra.mxu0 0.0
  %802 = vmatprep.subr.mxu0 0.0
  %803 = vmatpush1.msra.mxu0 0.0
  %804 = vmatprep.subr.mxu0 0.0
  %805 = vmatpush1.msra.mxu0 0.0
  %806 = vmatprep.subr.mxu0 0.0
  %807 = vmatpush1.msra.mxu0 0.0
  %808 = vmatprep.subr.mxu0 0.0
  %809 = vmatpush1.msra.mxu0 0.0
  %810 = vmatprep.subr.mxu0 0.0
  %811 = vmatpush1.msra.mxu0 0.0
  %812 = vmatprep.subr.mxu0 0.0
  %813 = vmatpush1.msra.mxu0 0.0
  %814 = vmatprep.subr.mxu0 0.0
  %815 = vmatpush1.msra.mxu0 0.0
  %816 = vmatprep.subr.mxu0 0.0
  %817 = vmatpush1.msra.mxu0 0.0
  %818 = vmatprep.subr.mxu0 0.0
  %819 = vmatpush1.msra.mxu0 0.0
  %820 = vmatprep.subr.mxu0 0.0
  %821 = vmatpush1.msra.mxu0 0.0
  %822 = vmatprep.subr.mxu0 0.0
  %823 = vmatpush1.msra.mxu0 0.0
  %824 = vmatprep.subr.mxu0 0.0
  %825 = vmatpush1.msra.mxu0 0.0
  %826 = vmatprep.subr.mxu0 0.0
  %827 = vmatpush1.msra.mxu0 0.0
  %828 = vmatprep.subr.mxu0 0.0
  %829 = vmatpush1.msra.mxu0 0.0
  %830 = vmatprep.subr.mxu0 0.0
  %831 = vmatpush1.msra.mxu0 0.0
  %832 = vmatprep.subr.mxu0 0.0
  %833 = vmatpush1.msra.mxu0 0.0
  %834 = vmatprep.subr.mxu0 0.0
  %835 = vmatpush1.msra.mxu0 0.0
  %836 = vmatprep.subr.mxu0 0.0
  %837 = vmatpush1.msra.mxu0 0.0
  %838 = vmatprep.subr.mxu0 0.0
  %839 = vmatpush1.msra.mxu0 0.0
  %840 = vmatprep.subr.mxu0 0.0
  %841 = vmatpush1.msra.mxu0 0.0
  %842 = vmatprep.subr.mxu0 0.0
  %843 = vmatpush1.msra.mxu0 0.0
  %844 = vmatprep.subr.mxu0 0.0
  %845 = vmatpush1.msra.mxu0 0.0
  %846 = vmatprep.subr.mxu0 0.0
  %847 = vmatpush1.msra.mxu0 0.0
  %848 = vmatprep.mubr.f32.mxu0 0.0
  %849 = vmatmul.mubr.f32.gmra.mrb[0].mxu0 %v782
  %v850 = vpop.f32.mrb[0].mxu0
  %v851 = vadd.f32 0.0, %v850
  %v852 = vpop.f32.mrb[0].mxu0
  %853 = vdwg.mxu0
  %v854 = vadd.f32 %v776, %v851
  %v855 = vrot.slane %v617, 3
  %v856 = vrot.slane %v618, 2
  %v857 = vsel %vm631, %v856, %v855
  %v858 = vsel %vm103, %v857, 0
  %860 = vmatprep.subr.mxu0 0.0
  %861 = vmatpush1.msra.mxu0 %v625
  %862 = vmatprep.subr.mxu0 0.0
  %863 = vmatpush1.msra.mxu0 %v626
  %864 = vmatprep.subr.mxu0 0.0
  %865 = vmatpush1.msra.mxu0 0.0
  %866 = vmatprep.subr.mxu0 0.0
  %867 = vmatpush1.msra.mxu0 0.0
  %868 = vmatprep.subr.mxu0 0.0
  %869 = vmatpush1.msra.mxu0 0.0
  %870 = vmatprep.subr.mxu0 0.0
  %871 = vmatpush1.msra.mxu0 0.0
  %872 = vmatprep.subr.mxu0 0.0
  %873 = vmatpush1.msra.mxu0 0.0
  %874 = vmatprep.subr.mxu0 0.0
  %875 = vmatpush1.msra.mxu0 0.0
  %876 = vmatprep.subr.mxu0 0.0
  %877 = vmatpush1.msra.mxu0 0.0
  %878 = vmatprep.subr.mxu0 0.0
  %879 = vmatpush1.msra.mxu0 0.0
  %880 = vmatprep.subr.mxu0 0.0
  %881 = vmatpush1.msra.mxu0 0.0
  %882 = vmatprep.subr.mxu0 0.0
  %883 = vmatpush1.msra.mxu0 0.0
  %884 = vmatprep.subr.mxu0 0.0
  %885 = vmatpush1.msra.mxu0 0.0
  %886 = vmatprep.subr.mxu0 0.0
  %887 = vmatpush1.msra.mxu0 0.0
  %888 = vmatprep.subr.mxu0 0.0
  %889 = vmatpush1.msra.mxu0 0.0
  %890 = vmatprep.subr.mxu0 0.0
  %891 = vmatpush1.msra.mxu0 0.0
  %892 = vmatprep.subr.mxu0 0.0
  %893 = vmatpush1.msra.mxu0 0.0
  %894 = vmatprep.subr.mxu0 0.0
  %895 = vmatpush1.msra.mxu0 0.0
  %896 = vmatprep.subr.mxu0 0.0
  %897 = vmatpush1.msra.mxu0 0.0
  %898 = vmatprep.subr.mxu0 0.0
  %899 = vmatpush1.msra.mxu0 0.0
  %900 = vmatprep.subr.mxu0 0.0
  %901 = vmatpush1.msra.mxu0 0.0
  %902 = vmatprep.subr.mxu0 0.0
  %903 = vmatpush1.msra.mxu0 0.0
  %904 = vmatprep.subr.mxu0 0.0
  %905 = vmatpush1.msra.mxu0 0.0
  %906 = vmatprep.subr.mxu0 0.0
  %907 = vmatpush1.msra.mxu0 0.0
  %908 = vmatprep.subr.mxu0 0.0
  %909 = vmatpush1.msra.mxu0 0.0
  %910 = vmatprep.subr.mxu0 0.0
  %911 = vmatpush1.msra.mxu0 0.0
  %912 = vmatprep.subr.mxu0 0.0
  %913 = vmatpush1.msra.mxu0 0.0
  %914 = vmatprep.subr.mxu0 0.0
  %915 = vmatpush1.msra.mxu0 0.0
  %916 = vmatprep.subr.mxu0 0.0
  %917 = vmatpush1.msra.mxu0 0.0
  %918 = vmatprep.subr.mxu0 0.0
  %919 = vmatpush1.msra.mxu0 0.0
  %920 = vmatprep.subr.mxu0 0.0
  %921 = vmatpush1.msra.mxu0 0.0
  %922 = vmatprep.subr.mxu0 0.0
  %923 = vmatpush1.msra.mxu0 0.0
  %924 = vmatprep.mubr.f32.mxu0 0.0
  %925 = vmatmul.mubr.f32.gmra.mrb[0].mxu0 %v858
  %v926 = vpop.f32.mrb[0].mxu0
  %v927 = vadd.f32 0.0, %v926
  %v928 = vpop.f32.mrb[0].mxu0
  %929 = vdwg.mxu0
  %v930 = vadd.f32 %v854, %v927
  %931 = vrot.lane.b32.xlu0 %v706, 112
  %v932 = vpop.permute.xlu0 %931
  %v934 = vmul.f32 %v930, %v932
  %v935 = vadd.f32 %v934, 0.0
  %v937 = vmul.f32 %v930, %v632
  %939 = vrot.lane.b32.xlu0 %v937, 112
  %v940 = vpop.permute.xlu0 %939
  %v942 = vadd.f32 %v935, %v940
  %943 = vrot.lane.b32.xlu0 %v781, 16
  %v944 = vpop.permute.xlu0 %943
  %v946 = vmul.f32 %v930, %v944
  %948 = vrot.lane.b32.xlu0 %v946, 96
  %v949 = vpop.permute.xlu0 %948
  %v951 = vadd.f32 %v942, %v949
  %952 = vrot.lane.b32.xlu0 %v857, 32
  %v953 = vpop.permute.xlu0 %952
  %v955 = vmul.f32 %v930, %v953
  %957 = vrot.lane.b32.xlu0 %v955, 80
  %v958 = vpop.permute.xlu0 %957
  %v960 = vadd.f32 %v951, %v958
  %vm961 = vcmask 123904
  %v962 = vsel %vm961, %v960, 0.0
  %963 = vadd.xlane.f32.xlu0 %v962
  %v964 = vpop.xlane.xlu0 %963
  %v965 = vlaneseq
  %v966 = vshrl.u32 %v965, 7
  %v967 = vsub.s32 0, %v966
  %v968 = vrot.slane %v627, %v967
  %v969 = vadd.f32 %v964, %v968
  %vm970 = vcmask 1024
  %971 = vst.msk [vmem:[%s3] sm:$0x3] %vm970, %v969
  // Predicated region
  $region14: #{cnn_lstm_forward.1} parent=0 // pred_check
    _
  $region15: #{cnn_lstm_forward.1} parent=0 // pred_check_branch
    %973 = sbr.rel (0) target = $region17
  $region16: #{cnn_lstm_forward.1} parent=0 // pred_region
    _
  $region17: #{cnn_lstm_forward.1} parent=0 // pred_fallthru
    _
  // Predicated region
  $region18: #{cnn_lstm_forward.1} parent=0 // pred_check
    _
  $region19: #{cnn_lstm_forward.1} parent=0 // pred_check_branch
    %975 = sbr.rel (0) target = $region21
  $region20: #{cnn_lstm_forward.1} parent=0 // pred_region
    _
  $region21: #{cnn_lstm_forward.1} parent=0 // pred_fallthru
    _

</llo_original>
